<compile_context>
chip_gen: v7x
topology: tpu7x:2x2x1
jax: 0.10.0
libtpu: 0.0.40
codegen_flags: <defaults>
</compile_context>

<pallas_src>
import jax
import jax.numpy as jnp
from jax.experimental import pallas as pl
from jax.experimental.pallas import tpu as pltpu


def _round_up(x, m):
    return ((x + m - 1) // m) * m


# ---------------------------------------------------------------------------
# Kernel body: one (tm, F) row tile of  relu(x @ W1 + b1) @ W2 + b2
# ---------------------------------------------------------------------------
def mlp_kernel(x_ref, w1_ref, b1_ref, w2_ref, b2_ref, o_ref):
    # Cast the f32 activations to bf16 in-kernel (VPU work hidden under the
    # MXU) so the wrapper never writes a bf16 copy of x to HBM.
    x = x_ref[...].astype(jnp.bfloat16)
    h = jnp.dot(x, w1_ref[...], preferred_element_type=jnp.float32)
    h = jnp.maximum(h + b1_ref[...], 0.0)
    # F.dropout(p=0.5, training=False) is the identity in eval mode.
    # TODO(synk): add pltpu.prng_seed/prng_random_bits mask + 1/(1-p) scaling
    #             if training-mode dropout is ever needed.
    y = jnp.dot(h.astype(jnp.bfloat16), w2_ref[...],
                preferred_element_type=jnp.float32)
    o_ref[...] = (y + b2_ref[...]).astype(o_ref.dtype)


# ---------------------------------------------------------------------------
# One-time parameter preparation (hoisted out of the per-call path)
# ---------------------------------------------------------------------------
def prepare_params(w1, b1, w2, b2):
    """Convert f32 params to MXU-ready operands ONCE; reuse on every call.

    w1: (F, H), b1: (H,)/(1,H), w2: (H, C), b2: (C,)/(1,C), all f32.
    Returns bf16 weights with the hidden dim padded to a multiple of 128 and
    f32 biases; the class dim C is deliberately left unpadded so output HBM
    stores stay narrow.
    """
    f, h = w1.shape
    c = w2.shape[1]
    h_p = _round_up(h, 128)
    w1p = jnp.zeros((f, h_p), jnp.bfloat16).at[:, :h].set(w1.astype(jnp.bfloat16))
    b1p = jnp.zeros((1, h_p), jnp.float32).at[:, :h].set(
        jnp.reshape(b1, (1, h)).astype(jnp.float32))
    w2p = jnp.zeros((h_p, c), jnp.bfloat16).at[:h, :].set(w2.astype(jnp.bfloat16))
    b2p = jnp.reshape(b2, (1, c)).astype(jnp.float32)
    return w1p, b1p, w2p, b2p


# ---------------------------------------------------------------------------
# Generation-aware tiling
# ---------------------------------------------------------------------------
def _vmem_capacity_bytes():
    try:
        return int(pltpu.get_tpu_info().vmem_capacity_bytes)
    except Exception:
        return 64 << 20  # conservative default (v7x per-TensorCore VMEM)


def _pick_row_tile(n, f, h_p, c, vmem_cap):
    """Largest row tile whose working set fits VMEM, minimizing tail padding."""
    n8 = _round_up(max(n, 1), 8)
    budget = int(0.70 * vmem_cap)
    # Resident weights + biases (single-buffered).
    weight_bytes = 2 * (f * h_p + h_p * c) + 4 * (h_p + c)

    def tile_bytes(tm):
        # x (f32, double-buffered) + out (f32, double-buffered)
        # + (tm, h_p) f32 intermediate + its bf16 recast.
        return 2 * tm * f * 4 + 2 * tm * c * 4 + tm * h_p * 6

    fitting = [t for t in (1024, 512, 256, 128, 64, 32, 16, 8)
               if weight_bytes + tile_bytes(t) <= budget]
    if not fitting:
        return 8
    # Prefer the largest tile (fewest grid steps) with <= ~6% junk rows,
    # otherwise minimize padded-row waste.
    for tm in fitting:
        n_p = _round_up(n8, tm)
        if (n_p - n8) * 16 <= n_p:
            return tm
    return min(fitting, key=lambda t: (_round_up(n8, t) - n8, -t))


# ---------------------------------------------------------------------------
# pallas_call construction + wrapper
# ---------------------------------------------------------------------------
def _build_mlp_call(n_p, f, h_p, c, tm, out_dtype, *, single_buffer_weights):
    if single_buffer_weights:
        def resident(shape):
            return pl.BlockSpec(shape, lambda i: (0, 0),
                                pipeline_mode=pl.Buffered(1))
    else:
        def resident(shape):
            return pl.BlockSpec(shape, lambda i: (0, 0))

    vmem_cap = _vmem_capacity_bytes()
    flops = 2 * n_p * (f * h_p + h_p * c)
    bytes_accessed = (n_p * f * 4 + n_p * c * 4
                      + 2 * (f * h_p + h_p * c) + 4 * (h_p + c))

    return pl.pallas_call(
        mlp_kernel,
        out_shape=jax.ShapeDtypeStruct((n_p, c), out_dtype),
        grid_spec=pl.GridSpec(
            grid=(n_p // tm,),
            in_specs=[
                pl.BlockSpec((tm, f), lambda i: (i, 0)),  # x: streamed row tiles
                resident((f, h_p)),                       # w1: resident in VMEM
                resident((1, h_p)),                       # b1: resident
                resident((h_p, c)),                       # w2: resident
                resident((1, c)),                         # b2: resident
            ],
            out_specs=pl.BlockSpec((tm, c), lambda i: (i, 0)),
        ),
        compiler_params=pltpu.CompilerParams(
            dimension_semantics=("parallel",),
            vmem_limit_bytes=min(int(0.90 * vmem_cap), 100 << 20),
        ),
        cost_estimate=pl.CostEstimate(
            flops=flops, transcendentals=0, bytes_accessed=bytes_accessed),
    )


def mlp_forward(x, w1p, b1p, w2p, b2p, *, tm=None):
    """x: (N, F) f32; prepared params from `prepare_params`. Returns (N, C) f32."""
    n, f = x.shape
    h_p = w1p.shape[1]
    c = w2p.shape[1]
    assert w1p.shape[0] == f and b1p.shape == (1, h_p)
    assert w2p.shape == (h_p, c) and b2p.shape == (1, c)

    vmem_cap = _vmem_capacity_bytes()
    if tm is None:
        tm = _pick_row_tile(n, f, h_p, c, vmem_cap)
    n_p = _round_up(n, tm)
    xp = x if n_p == n else jnp.zeros((n_p, f), x.dtype).at[:n].set(x)

    # TODO(synk): for very large hidden dims (single-buffered bf16 weights
    #             > ~40 MiB) add an H-tiled grid axis with an f32 accumulator
    #             (pl.when init/writeback) so VMEM stays bounded on v7x.
    # TODO(synk): optional int8 (v5e/v6e) / fp8 (v7x) weight quantization with
    #             per-channel scales folded into the f32 epilogue.
    try:
        out_p = _build_mlp_call(
            n_p, f, h_p, c, tm, jnp.float32,
            single_buffer_weights=True)(xp, w1p, b1p, w2p, b2p)
    except Exception:
        # pipeline_mode=pl.Buffered(1) unavailable on this jax/libtpu:
        # fall back to default double-buffered resident weights.
        out_p = _build_mlp_call(
            n_p, f, h_p, c, tm, jnp.float32,
            single_buffer_weights=False)(xp, w1p, b1p, w2p, b2p)

    return out_p if n_p == n else out_p[:n]


def init_params(key, num_features, hidden_channels, num_classes):
    # Deterministic synthetic init (mimics torch Linear's uniform fan-in scaling).
    k1, k2, k3, k4 = jax.random.split(key, 4)
    s1 = 1.0 / jnp.sqrt(num_features)
    s2 = 1.0 / jnp.sqrt(hidden_channels)
    w1 = jax.random.uniform(k1, (num_features, hidden_channels),
                            minval=-s1, maxval=s1, dtype=jnp.float32)
    b1 = jax.random.uniform(k2, (1, hidden_channels),
                            minval=-s1, maxval=s1, dtype=jnp.float32)
    w2 = jax.random.uniform(k3, (hidden_channels, num_classes),
                            minval=-s2, maxval=s2, dtype=jnp.float32)
    b2 = jax.random.uniform(k4, (1, num_classes),
                            minval=-s2, maxval=s2, dtype=jnp.float32)
    return w1, b1, w2, b2


if __name__ == "__main__":
    # Small shapes: N=8 "nodes", num_features=16, hidden=32, num_classes=4
    N, NUM_FEATURES, HIDDEN, NUM_CLASSES = 8, 16, 32, 4
    key = jax.random.PRNGKey(0)
    kx, kp = jax.random.split(key)
    x = jax.random.normal(kx, (N, NUM_FEATURES), dtype=jnp.float32)
    w1, b1, w2, b2 = init_params(kp, NUM_FEATURES, HIDDEN, NUM_CLASSES)

    # One-time weight prep (hoisted out of the per-call path).
    w1p, b1p, w2p, b2p = prepare_params(w1, b1, w2, b2)

    out = mlp_forward(x, w1p, b1p, w2p, b2p)
    jax.block_until_ready(out)

    # Pure-JAX references.
    # f32 reference (semantics check; bf16 MXU operands => ~1e-2 rel contract):
    ref_f32 = jnp.maximum(x @ w1 + b1, 0.0) @ w2 + b2
    # bf16-matched reference (tight tolerance):
    h_ref = jnp.maximum(
        jnp.dot(x.astype(jnp.bfloat16), w1.astype(jnp.bfloat16),
                preferred_element_type=jnp.float32) + b1, 0.0)
    ref_bf16 = jnp.dot(h_ref.astype(jnp.bfloat16), w2.astype(jnp.bfloat16),
                       preferred_element_type=jnp.float32) + b2

    assert out.shape == (N, NUM_CLASSES)
    assert jnp.allclose(out, ref_bf16, atol=1e-3, rtol=1e-3)
    assert jnp.allclose(out, ref_f32, atol=3e-2, rtol=3e-2)
    print("KERNEL_OK")
</pallas_src>

<mosaic_0001>
module attributes {stable_mosaic.version = 11 : i64} {
  func.func @mlp_kernel(%arg0: i32, %arg1: memref<8x16xf32, #tpu.memory_space<vmem>>, %arg2: memref<16x128xbf16, #tpu.memory_space<vmem>>, %arg3: memref<1x128xf32, #tpu.memory_space<vmem>>, %arg4: memref<128x4xbf16, #tpu.memory_space<vmem>>, %arg5: memref<1x4xf32, #tpu.memory_space<vmem>>, %arg6: memref<8x4xf32, #tpu.memory_space<vmem>>) attributes {dimension_semantics = [#tpu.dimension_semantics<parallel>], iteration_bounds = array<i64: 1>, scalar_prefetch = 0 : i64, scratch_operands = 0 : i64, tpu.core_type = #tpu.core_type<tc>, window_params = [{transform_indices = @transform_0, window_bounds = array<i64: 8, 16>}, {pipeline_mode = #tpu.pipeline_mode<synchronous>, transform_indices = @transform_1, window_bounds = array<i64: 16, 128>}, {pipeline_mode = #tpu.pipeline_mode<synchronous>, transform_indices = @transform_2, window_bounds = array<i64: 1, 128>}, {pipeline_mode = #tpu.pipeline_mode<synchronous>, transform_indices = @transform_3, window_bounds = array<i64: 128, 4>}, {pipeline_mode = #tpu.pipeline_mode<synchronous>, transform_indices = @transform_4, window_bounds = array<i64: 1, 4>}, {transform_indices = @transform_5, window_bounds = array<i64: 8, 4>}]} {
    %c0 = arith.constant 0 : index
    %c0_0 = arith.constant 0 : index
    %0 = vector.load %arg1[%c0, %c0_0] : memref<8x16xf32, #tpu.memory_space<vmem>>, vector<8x16xf32>
    %1 = arith.truncf %0 : vector<8x16xf32> to vector<8x16xbf16>
    %c0_1 = arith.constant 0 : index
    %c0_2 = arith.constant 0 : index
    %2 = vector.load %arg2[%c0_1, %c0_2] : memref<16x128xbf16, #tpu.memory_space<vmem>>, vector<16x128xbf16>
    %cst = arith.constant dense<0.000000e+00> : vector<8x128xf32>
    %3 = tpu.matmul %1, %2, %cst {dimension_numbers = #tpu.dot_dimension_numbers<[1], [0], [0], [1], [0, 0, 1, 1], [], []>} : vector<8x16xbf16>, vector<16x128xbf16>, vector<8x128xf32> -> vector<8x128xf32>
    %c0_3 = arith.constant 0 : index
    %c0_4 = arith.constant 0 : index
    %4 = vector.load %arg3[%c0_3, %c0_4] : memref<1x128xf32, #tpu.memory_space<vmem>>, vector<1x128xf32>
    %5 = vector.broadcast %4 : vector<1x128xf32> to vector<8x128xf32>
    %6 = arith.addf %3, %5 : vector<8x128xf32>
    %cst_5 = arith.constant 0.000000e+00 : f32
    %7 = vector.broadcast %cst_5 : f32 to vector<8x128xf32>
    %8 = arith.maximumf %6, %7 : vector<8x128xf32>
    %9 = arith.truncf %8 : vector<8x128xf32> to vector<8x128xbf16>
    %c0_6 = arith.constant 0 : index
    %c0_7 = arith.constant 0 : index
    %10 = vector.load %arg4[%c0_6, %c0_7] : memref<128x4xbf16, #tpu.memory_space<vmem>>, vector<128x4xbf16>
    %cst_8 = arith.constant dense<0.000000e+00> : vector<8x4xf32>
    %11 = tpu.matmul %9, %10, %cst_8 {dimension_numbers = #tpu.dot_dimension_numbers<[1], [0], [0], [1], [0, 0, 1, 1], [], []>} : vector<8x128xbf16>, vector<128x4xbf16>, vector<8x4xf32> -> vector<8x4xf32>
    %c0_9 = arith.constant 0 : index
    %c0_10 = arith.constant 0 : index
    %12 = vector.load %arg5[%c0_9, %c0_10] : memref<1x4xf32, #tpu.memory_space<vmem>>, vector<1x4xf32>
    %13 = vector.broadcast %12 : vector<1x4xf32> to vector<8x4xf32>
    %14 = arith.addf %11, %13 : vector<8x4xf32>
    %c0_11 = arith.constant 0 : index
    %c0_12 = arith.constant 0 : index
    %15 = vector.load %arg6[%c0_11, %c0_12] : memref<8x4xf32, #tpu.memory_space<vmem>>, vector<8x4xf32>
    tpu.vector_store %arg6[%c0_11, %c0_12], %14 {strides = array<i32>} : memref<8x4xf32, #tpu.memory_space<vmem>>, vector<8x4xf32>,
    return
  }
  func.func @transform_0(%arg0: i32) -> (i32, i32) {
    %c0_i32 = arith.constant 0 : i32
    %c0_i32_0 = arith.constant 0 : i32
    return %arg0, %c0_i32 : i32, i32
  }
  func.func @transform_1(%arg0: i32) -> (i32, i32) {
    %c0_i32 = arith.constant 0 : i32
    %c0_i32_0 = arith.constant 0 : i32
    %c0_i32_1 = arith.constant 0 : i32
    return %c0_i32, %c0_i32_0 : i32, i32
  }
  func.func @transform_2(%arg0: i32) -> (i32, i32) {
    %c0_i32 = arith.constant 0 : i32
    %c0_i32_0 = arith.constant 0 : i32
    %c0_i32_1 = arith.constant 0 : i32
    return %c0_i32, %c0_i32_0 : i32, i32
  }
  func.func @transform_3(%arg0: i32) -> (i32, i32) {
    %c0_i32 = arith.constant 0 : i32
    %c0_i32_0 = arith.constant 0 : i32
    %c0_i32_1 = arith.constant 0 : i32
    return %c0_i32, %c0_i32_0 : i32, i32
  }
  func.func @transform_4(%arg0: i32) -> (i32, i32) {
    %c0_i32 = arith.constant 0 : i32
    %c0_i32_0 = arith.constant 0 : i32
    %c0_i32_1 = arith.constant 0 : i32
    return %c0_i32, %c0_i32_0 : i32, i32
  }
  func.func @transform_5(%arg0: i32) -> (i32, i32) {
    %c0_i32 = arith.constant 0 : i32
    %c0_i32_0 = arith.constant 0 : i32
    return %arg0, %c0_i32 : i32, i32
  }
}

module attributes {stable_mosaic.version = 11 : i64} {
  func.func @mlp_kernel(%arg0: i32, %arg1: memref<8x16xf32, #tpu.memory_space<vmem>>, %arg2: memref<16x128xbf16, #tpu.memory_space<vmem>>, %arg3: memref<1x128xf32, #tpu.memory_space<vmem>>, %arg4: memref<128x4xbf16, #tpu.memory_space<vmem>>, %arg5: memref<1x4xf32, #tpu.memory_space<vmem>>, %arg6: memref<8x4xf32, #tpu.memory_space<vmem>>) attributes {dimension_semantics = [#tpu.dimension_semantics<parallel>], iteration_bounds = array<i64: 1>, scalar_prefetch = 0 : i64, scratch_operands = 0 : i64, tpu.core_type = #tpu.core_type<tc>, window_params = [{transform_indices = @transform_0, window_bounds = array<i64: 8, 16>}, {pipeline_mode = #tpu.pipeline_mode<synchronous>, transform_indices = @transform_1, window_bounds = array<i64: 16, 128>}, {pipeline_mode = #tpu.pipeline_mode<synchronous>, transform_indices = @transform_2, window_bounds = array<i64: 1, 128>}, {pipeline_mode = #tpu.pipeline_mode<synchronous>, transform_indices = @transform_3, window_bounds = array<i64: 128, 4>}, {pipeline_mode = #tpu.pipeline_mode<synchronous>, transform_indices = @transform_4, window_bounds = array<i64: 1, 4>}, {transform_indices = @transform_5, window_bounds = array<i64: 8, 4>}]} {
    %c0 = arith.constant 0 : index
    %c0_0 = arith.constant 0 : index
    %0 = vector.load %arg1[%c0, %c0_0] : memref<8x16xf32, #tpu.memory_space<vmem>>, vector<8x16xf32>
    %1 = arith.truncf %0 : vector<8x16xf32> to vector<8x16xbf16>
    %c0_1 = arith.constant 0 : index
    %c0_2 = arith.constant 0 : index
    %2 = vector.load %arg2[%c0_1, %c0_2] : memref<16x128xbf16, #tpu.memory_space<vmem>>, vector<16x128xbf16>
    %cst = arith.constant dense<0.000000e+00> : vector<8x128xf32>
    %3 = tpu.matmul %1, %2, %cst {dimension_numbers = #tpu.dot_dimension_numbers<[1], [0], [0], [1], [0, 0, 1, 1], [], []>} : vector<8x16xbf16>, vector<16x128xbf16>, vector<8x128xf32> -> vector<8x128xf32>
    %c0_3 = arith.constant 0 : index
    %c0_4 = arith.constant 0 : index
    %4 = vector.load %arg3[%c0_3, %c0_4] : memref<1x128xf32, #tpu.memory_space<vmem>>, vector<1x128xf32>
    %5 = vector.broadcast %4 : vector<1x128xf32> to vector<8x128xf32>
    %6 = arith.addf %3, %5 : vector<8x128xf32>
    %cst_5 = arith.constant 0.000000e+00 : f32
    %7 = vector.broadcast %cst_5 : f32 to vector<8x128xf32>
    %8 = arith.maximumf %6, %7 : vector<8x128xf32>
    %9 = arith.truncf %8 : vector<8x128xf32> to vector<8x128xbf16>
    %c0_6 = arith.constant 0 : index
    %c0_7 = arith.constant 0 : index
    %10 = vector.load %arg4[%c0_6, %c0_7] : memref<128x4xbf16, #tpu.memory_space<vmem>>, vector<128x4xbf16>
    %cst_8 = arith.constant dense<0.000000e+00> : vector<8x4xf32>
    %11 = tpu.matmul %9, %10, %cst_8 {dimension_numbers = #tpu.dot_dimension_numbers<[1], [0], [0], [1], [0, 0, 1, 1], [], []>} : vector<8x128xbf16>, vector<128x4xbf16>, vector<8x4xf32> -> vector<8x4xf32>
    %c0_9 = arith.constant 0 : index
    %c0_10 = arith.constant 0 : index
    %12 = vector.load %arg5[%c0_9, %c0_10] : memref<1x4xf32, #tpu.memory_space<vmem>>, vector<1x4xf32>
    %13 = vector.broadcast %12 : vector<1x4xf32> to vector<8x4xf32>
    %14 = arith.addf %11, %13 : vector<8x4xf32>
    %c0_11 = arith.constant 0 : index
    %c0_12 = arith.constant 0 : index
    %15 = vector.load %arg6[%c0_11, %c0_12] : memref<8x4xf32, #tpu.memory_space<vmem>>, vector<8x4xf32>
    tpu.vector_store %arg6[%c0_11, %c0_12], %14 {strides = array<i32>} : memref<8x4xf32, #tpu.memory_space<vmem>>, vector<8x4xf32>,
    return
  }
  func.func @transform_0(%arg0: i32) -> (i32, i32) {
    %c0_i32 = arith.constant 0 : i32
    %c0_i32_0 = arith.constant 0 : i32
    return %arg0, %c0_i32 : i32, i32
  }
  func.func @transform_1(%arg0: i32) -> (i32, i32) {
    %c0_i32 = arith.constant 0 : i32
    %c0_i32_0 = arith.constant 0 : i32
    %c0_i32_1 = arith.constant 0 : i32
    return %c0_i32, %c0_i32_0 : i32, i32
  }
  func.func @transform_2(%arg0: i32) -> (i32, i32) {
    %c0_i32 = arith.constant 0 : i32
    %c0_i32_0 = arith.constant 0 : i32
    %c0_i32_1 = arith.constant 0 : i32
    return %c0_i32, %c0_i32_0 : i32, i32
  }
  func.func @transform_3(%arg0: i32) -> (i32, i32) {
    %c0_i32 = arith.constant 0 : i32
    %c0_i32_0 = arith.constant 0 : i32
    %c0_i32_1 = arith.constant 0 : i32
    return %c0_i32, %c0_i32_0 : i32, i32
  }
  func.func @transform_4(%arg0: i32) -> (i32, i32) {
    %c0_i32 = arith.constant 0 : i32
    %c0_i32_0 = arith.constant 0 : i32
    %c0_i32_1 = arith.constant 0 : i32
    return %c0_i32, %c0_i32_0 : i32, i32
  }
  func.func @transform_5(%arg0: i32) -> (i32, i32) {
    %c0_i32 = arith.constant 0 : i32
    %c0_i32_0 = arith.constant 0 : i32
    return %arg0, %c0_i32 : i32, i32
  }
}

</mosaic_0001>

<llo_original>
// kernel: tpu_custom_call.1
$region0: #{tpu_custom_call.1}
  #allocation0 [shape = 'u32[]', space=smem, size = 0x4, offset = 0x4, fixed_abs, tag = 'smem constant byte address 0x4 - core index']
  #allocation1 [shape = 'u32[144,128]{1,0:T(1,128)}', space=vmem, size = 0x12000, scoped, tag = 'internal scratch']
  %s0 = inlined_call_operand.vmem [shape: f32[8,16], index: 0, kind: input, shape index: {}]
  %s1 = inlined_call_operand.vmem [shape: bf16[16,128], index: 1, kind: input, shape index: {}]
  %s2 = inlined_call_operand.vmem [shape: f32[1,128], index: 2, kind: input, shape index: {}]
  %s3 = inlined_call_operand.vmem [shape: bf16[128,4], index: 3, kind: input, shape index: {}]
  %s4 = inlined_call_operand.vmem [shape: f32[1,4], index: 4, kind: input, shape index: {}]
  %s5 = inlined_call_operand.vmem [shape: f32[8,4], index: 5, kind: output, shape index: {}]
  %s6 = sld [smem:[#allocation0]]
  $region30: #{tpu_custom_call.1} parent=0
    _
  %s8 = ssub.s32 1, %s6
  %s9 = scalar_select 0, %s8, %s6
  // Predicated region
  $region2: #{tpu_custom_call.1} parent=0 // pred_check
    _
  $region3: #{tpu_custom_call.1} parent=0 // pred_check_branch
    %11 = sbr.rel (0) target = $region5
  $region4: #{tpu_custom_call.1} parent=0 // pred_region
    _
  $region5: #{tpu_custom_call.1} parent=0 // pred_fallthru
    _
  // Predicated region
  $region6: #{tpu_custom_call.1} parent=0 // pred_check
    _
  $region7: #{tpu_custom_call.1} parent=0 // pred_check_branch
    %13 = sbr.rel (0) target = $region9
  $region8: #{tpu_custom_call.1} parent=0 // pred_region
    _
  $region9: #{tpu_custom_call.1} parent=0 // pred_fallthru
    _
  // Predicated region
  $region10: #{tpu_custom_call.1} parent=0 // pred_check
    _
  $region11: #{tpu_custom_call.1} parent=0 // pred_check_branch
    %15 = sbr.rel (0) target = $region13
  $region12: #{tpu_custom_call.1} parent=0 // pred_region
    _
  $region13: #{tpu_custom_call.1} parent=0 // pred_fallthru
    _
  // Predicated region
  $region14: #{tpu_custom_call.1} parent=0 // pred_check
    _
  $region15: #{tpu_custom_call.1} parent=0 // pred_check_branch
    %17 = sbr.rel (0) target = $region17
  $region16: #{tpu_custom_call.1} parent=0 // pred_region
    _
  $region17: #{tpu_custom_call.1} parent=0 // pred_fallthru
    _
  // Predicated region
  $region18: #{tpu_custom_call.1} parent=0 // pred_check
    _
  $region19: #{tpu_custom_call.1} parent=0 // pred_check_branch
    %19 = sbr.rel (0) target = $region21
  $region20: #{tpu_custom_call.1} parent=0 // pred_region
    _
  $region21: #{tpu_custom_call.1} parent=0 // pred_fallthru
    _
  %v21 = vld [vmem:[%s0] sm:$0xff]
  %v22 = vpack.c.bf16 %v21, %v21
  %v23 = vld [vmem:[%s1] sm:$0xf]
  %v24 = vld [vmem:[%s1 + $0x4] sm:$0xf]
  %v25 = vld [vmem:[%s2] sm:$0x1]
  %v27 = vlaneseq
  %v28 = vshrl.u32 %v27, 7
  %v29 = vsub.s32 0, %v28
  %v30 = vrot.slane %v25, %v29
  %v34 = vunpack.c.l.b16 %v23
  %v35 = vunpack.c.l.b16 %v24
  %v36 = vpack.c.b16 %v35, %v34
  %vm38 = vcmask 130048
  %v40 = vsel %vm38, %v22, 0
  %42 = vmatprep.subr.bf16.mxu0 0
  %43 = vmatpush1.bf16.msra.mxu0 %v36
  %44 = vmatprep.subr.bf16.mxu0 0
  %45 = vmatpush1.bf16.msra.mxu0 0
  %46 = vmatprep.subr.bf16.mxu0 0
  %47 = vmatpush1.bf16.msra.mxu0 0
  %48 = vmatprep.subr.bf16.mxu0 0
  %49 = vmatpush1.bf16.msra.mxu0 0
  %50 = vmatprep.subr.bf16.mxu0 0
  %51 = vmatpush1.bf16.msra.mxu0 0
  %52 = vmatprep.subr.bf16.mxu0 0
  %53 = vmatpush1.bf16.msra.mxu0 0
  %54 = vmatprep.subr.bf16.mxu0 0
  %55 = vmatpush1.bf16.msra.mxu0 0
  %56 = vmatprep.subr.bf16.mxu0 0
  %57 = vmatpush1.bf16.msra.mxu0 0
  %58 = vmatprep.subr.bf16.mxu0 0
  %59 = vmatpush1.bf16.msra.mxu0 0
  %60 = vmatprep.subr.bf16.mxu0 0
  %61 = vmatpush1.bf16.msra.mxu0 0
  %62 = vmatprep.subr.bf16.mxu0 0
  %63 = vmatpush1.bf16.msra.mxu0 0
  %64 = vmatprep.subr.bf16.mxu0 0
  %65 = vmatpush1.bf16.msra.mxu0 0
  %66 = vmatprep.subr.bf16.mxu0 0
  %67 = vmatpush1.bf16.msra.mxu0 0
  %68 = vmatprep.subr.bf16.mxu0 0
  %69 = vmatpush1.bf16.msra.mxu0 0
  %70 = vmatprep.subr.bf16.mxu0 0
  %71 = vmatpush1.bf16.msra.mxu0 0
  %72 = vmatprep.subr.bf16.mxu0 0
  %73 = vmatpush1.bf16.msra.mxu0 0
  %74 = vmatprep.mubr.bf16.mxu0 0
  %75 = vmatmul.mubr.bf16.gmra.mrb[0].mxu0 %v40
  %v76 = vpop.f32.mrb[0].mxu0
  %v77 = vadd.f32 %v30, %v76
  %v78 = vpop.f32.mrb[0].mxu0
  %v79 = vpop.f32.mrb[0].mxu0
  %v80 = vpop.f32.mrb[0].mxu0
  %81 = vdwg.mxu0
  %v82 = vmax.f32 %v77, 0.0
  %v83 = vpack.c.bf16 %v82, %v82
  %v84 = vld [vmem:[%s3] sm:$0xf]
  %v85 = vld [vmem:[%s3 + $0x4] sm:$0xf]
  %v86 = vld [vmem:[%s3 + $0x8] sm:$0xf]
  %v87 = vld [vmem:[%s3 + $0xc] sm:$0xf]
  %v88 = vld [vmem:[%s3 + $0x10] sm:$0xf]
  %v89 = vld [vmem:[%s3 + $0x14] sm:$0xf]
  %v90 = vld [vmem:[%s3 + $0x18] sm:$0xf]
  %v91 = vld [vmem:[%s3 + $0x1c] sm:$0xf]
  %v92 = vld [vmem:[%s3 + $0x20] sm:$0xf]
  %v93 = vld [vmem:[%s3 + $0x24] sm:$0xf]
  %v94 = vld [vmem:[%s3 + $0x28] sm:$0xf]
  %v95 = vld [vmem:[%s3 + $0x2c] sm:$0xf]
  %v96 = vld [vmem:[%s3 + $0x30] sm:$0xf]
  %v97 = vld [vmem:[%s3 + $0x34] sm:$0xf]
  %v98 = vld [vmem:[%s3 + $0x38] sm:$0xf]
  %v99 = vld [vmem:[%s3 + $0x3c] sm:$0xf]
  %v100 = vld [vmem:[%s4] sm:$0x1]
  %v102 = vlaneseq
  %v103 = vshrl.u32 %v102, 7
  %v104 = vsub.s32 0, %v103
  %v105 = vrot.slane %v100, %v104
  %v123 = vunpack.c.l.b16 %v84
  %v124 = vunpack.c.l.b16 %v85
  %v125 = vunpack.c.l.b16 %v86
  %v126 = vunpack.c.l.b16 %v87
  %v127 = vunpack.c.l.b16 %v88
  %v128 = vunpack.c.l.b16 %v89
  %v129 = vunpack.c.l.b16 %v90
  %v130 = vunpack.c.l.b16 %v91
  %v131 = vunpack.c.l.b16 %v92
  %v132 = vunpack.c.l.b16 %v93
  %v133 = vunpack.c.l.b16 %v94
  %v134 = vunpack.c.l.b16 %v95
  %v135 = vunpack.c.l.b16 %v96
  %v136 = vunpack.c.l.b16 %v97
  %v137 = vunpack.c.l.b16 %v98
  %v138 = vunpack.c.l.b16 %v99
  %v139 = vpack.c.b16 %v124, %v123
  %v140 = vpack.c.b16 %v126, %v125
  %v141 = vpack.c.b16 %v128, %v127
  %v142 = vpack.c.b16 %v130, %v129
  %v143 = vpack.c.b16 %v132, %v131
  %v144 = vpack.c.b16 %v134, %v133
  %v145 = vpack.c.b16 %v136, %v135
  %v146 = vpack.c.b16 %v138, %v137
  %155 = vmatprep.subr.bf16.mxu0 0
  %156 = vmatpush1.bf16.msra.mxu0 %v139
  %157 = vmatprep.subr.bf16.mxu0 0
  %158 = vmatpush1.bf16.msra.mxu0 %v140
  %159 = vmatprep.subr.bf16.mxu0 0
  %160 = vmatpush1.bf16.msra.mxu0 %v141
  %161 = vmatprep.subr.bf16.mxu0 0
  %162 = vmatpush1.bf16.msra.mxu0 %v142
  %163 = vmatprep.subr.bf16.mxu0 0
  %164 = vmatpush1.bf16.msra.mxu0 %v143
  %165 = vmatprep.subr.bf16.mxu0 0
  %166 = vmatpush1.bf16.msra.mxu0 %v144
  %167 = vmatprep.subr.bf16.mxu0 0
  %168 = vmatpush1.bf16.msra.mxu0 %v145
  %169 = vmatprep.subr.bf16.mxu0 0
  %170 = vmatpush1.bf16.msra.mxu0 %v146
  %171 = vmatprep.subr.bf16.mxu0 0
  %172 = vmatpush1.bf16.msra.mxu0 0
  %173 = vmatprep.subr.bf16.mxu0 0
  %174 = vmatpush1.bf16.msra.mxu0 0
  %175 = vmatprep.subr.bf16.mxu0 0
  %176 = vmatpush1.bf16.msra.mxu0 0
  %177 = vmatprep.subr.bf16.mxu0 0
  %178 = vmatpush1.bf16.msra.mxu0 0
  %179 = vmatprep.subr.bf16.mxu0 0
  %180 = vmatpush1.bf16.msra.mxu0 0
  %181 = vmatprep.subr.bf16.mxu0 0
  %182 = vmatpush1.bf16.msra.mxu0 0
  %183 = vmatprep.subr.bf16.mxu0 0
  %184 = vmatpush1.bf16.msra.mxu0 0
  %185 = vmatprep.subr.bf16.mxu0 0
  %186 = vmatpush1.bf16.msra.mxu0 0
  %187 = vmatprep.mubr.bf16.mxu0 0
  %188 = vmatmul.mubr.bf16.gmra.mrb[0].mxu0 %v83
  %v189 = vpop.f32.mrb[0].mxu0
  %v190 = vadd.f32 %v105, %v189
  %v191 = vpop.f32.mrb[0].mxu0
  %v192 = vpop.f32.mrb[0].mxu0
  %v193 = vpop.f32.mrb[0].mxu0
  %194 = vdwg.mxu0
  %vm195 = vcmask 31744
  %196 = vst.msk [vmem:[%s5] sm:$0xff] %vm195, %v190
  // Predicated region
  $region22: #{tpu_custom_call.1} parent=0 // pred_check
    _
  $region23: #{tpu_custom_call.1} parent=0 // pred_check_branch
    %198 = sbr.rel (0) target = $region25
  $region24: #{tpu_custom_call.1} parent=0 // pred_region
    _
  $region25: #{tpu_custom_call.1} parent=0 // pred_fallthru
    _
  // Predicated region
  $region26: #{tpu_custom_call.1} parent=0 // pred_check
    _
  $region27: #{tpu_custom_call.1} parent=0 // pred_check_branch
    %200 = sbr.rel (0) target = $region29
  $region28: #{tpu_custom_call.1} parent=0 // pred_region
    _
  $region29: #{tpu_custom_call.1} parent=0 // pred_fallthru
    _

// kernel: tpu_custom_call.1
$region0: #{tpu_custom_call.1}
  #allocation0 [shape = 'u32[]', space=smem, size = 0x4, offset = 0x4, fixed_abs, tag = 'smem constant byte address 0x4 - core index']
  #allocation1 [shape = 'u32[144,128]{1,0:T(1,128)}', space=vmem, size = 0x12000, scoped, tag = 'internal scratch']
  %s0 = inlined_call_operand.vmem [shape: f32[8,16], index: 0, kind: input, shape index: {}]
  %s1 = inlined_call_operand.vmem [shape: bf16[16,128], index: 1, kind: input, shape index: {}]
  %s2 = inlined_call_operand.vmem [shape: f32[1,128], index: 2, kind: input, shape index: {}]
  %s3 = inlined_call_operand.vmem [shape: bf16[128,4], index: 3, kind: input, shape index: {}]
  %s4 = inlined_call_operand.vmem [shape: f32[1,4], index: 4, kind: input, shape index: {}]
  %s5 = inlined_call_operand.vmem [shape: f32[8,4], index: 5, kind: output, shape index: {}]
  %s6 = sld [smem:[#allocation0]]
  $region30: #{tpu_custom_call.1} parent=0
    _
  %s8 = ssub.s32 1, %s6
  %s9 = scalar_select 0, %s8, %s6
  // Predicated region
  $region2: #{tpu_custom_call.1} parent=0 // pred_check
    _
  $region3: #{tpu_custom_call.1} parent=0 // pred_check_branch
    %11 = sbr.rel (0) target = $region5
  $region4: #{tpu_custom_call.1} parent=0 // pred_region
    _
  $region5: #{tpu_custom_call.1} parent=0 // pred_fallthru
    _
  // Predicated region
  $region6: #{tpu_custom_call.1} parent=0 // pred_check
    _
  $region7: #{tpu_custom_call.1} parent=0 // pred_check_branch
    %13 = sbr.rel (0) target = $region9
  $region8: #{tpu_custom_call.1} parent=0 // pred_region
    _
  $region9: #{tpu_custom_call.1} parent=0 // pred_fallthru
    _
  // Predicated region
  $region10: #{tpu_custom_call.1} parent=0 // pred_check
    _
  $region11: #{tpu_custom_call.1} parent=0 // pred_check_branch
    %15 = sbr.rel (0) target = $region13
  $region12: #{tpu_custom_call.1} parent=0 // pred_region
    _
  $region13: #{tpu_custom_call.1} parent=0 // pred_fallthru
    _
  // Predicated region
  $region14: #{tpu_custom_call.1} parent=0 // pred_check
    _
  $region15: #{tpu_custom_call.1} parent=0 // pred_check_branch
    %17 = sbr.rel (0) target = $region17
  $region16: #{tpu_custom_call.1} parent=0 // pred_region
    _
  $region17: #{tpu_custom_call.1} parent=0 // pred_fallthru
    _
  // Predicated region
  $region18: #{tpu_custom_call.1} parent=0 // pred_check
    _
  $region19: #{tpu_custom_call.1} parent=0 // pred_check_branch
    %19 = sbr.rel (0) target = $region21
  $region20: #{tpu_custom_call.1} parent=0 // pred_region
    _
  $region21: #{tpu_custom_call.1} parent=0 // pred_fallthru
    _
  %v21 = vld [vmem:[%s0] sm:$0xff]
  %v22 = vpack.c.bf16 %v21, %v21
  %v23 = vld [vmem:[%s1] sm:$0xf]
  %v24 = vld [vmem:[%s1 + $0x4] sm:$0xf]
  %v25 = vld [vmem:[%s2] sm:$0x1]
  %v27 = vlaneseq
  %v28 = vshrl.u32 %v27, 7
  %v29 = vsub.s32 0, %v28
  %v30 = vrot.slane %v25, %v29
  %v34 = vunpack.c.l.b16 %v23
  %v35 = vunpack.c.l.b16 %v24
  %v36 = vpack.c.b16 %v35, %v34
  %vm38 = vcmask 130048
  %v40 = vsel %vm38, %v22, 0
  %42 = vmatprep.subr.bf16.mxu0 0
  %43 = vmatpush1.bf16.msra.mxu0 %v36
  %44 = vmatprep.subr.bf16.mxu0 0
  %45 = vmatpush1.bf16.msra.mxu0 0
  %46 = vmatprep.subr.bf16.mxu0 0
  %47 = vmatpush1.bf16.msra.mxu0 0
  %48 = vmatprep.subr.bf16.mxu0 0
  %49 = vmatpush1.bf16.msra.mxu0 0
  %50 = vmatprep.subr.bf16.mxu0 0
  %51 = vmatpush1.bf16.msra.mxu0 0
  %52 = vmatprep.subr.bf16.mxu0 0
  %53 = vmatpush1.bf16.msra.mxu0 0
  %54 = vmatprep.subr.bf16.mxu0 0
  %55 = vmatpush1.bf16.msra.mxu0 0
  %56 = vmatprep.subr.bf16.mxu0 0
  %57 = vmatpush1.bf16.msra.mxu0 0
  %58 = vmatprep.subr.bf16.mxu0 0
  %59 = vmatpush1.bf16.msra.mxu0 0
  %60 = vmatprep.subr.bf16.mxu0 0
  %61 = vmatpush1.bf16.msra.mxu0 0
  %62 = vmatprep.subr.bf16.mxu0 0
  %63 = vmatpush1.bf16.msra.mxu0 0
  %64 = vmatprep.subr.bf16.mxu0 0
  %65 = vmatpush1.bf16.msra.mxu0 0
  %66 = vmatprep.subr.bf16.mxu0 0
  %67 = vmatpush1.bf16.msra.mxu0 0
  %68 = vmatprep.subr.bf16.mxu0 0
  %69 = vmatpush1.bf16.msra.mxu0 0
  %70 = vmatprep.subr.bf16.mxu0 0
  %71 = vmatpush1.bf16.msra.mxu0 0
  %72 = vmatprep.subr.bf16.mxu0 0
  %73 = vmatpush1.bf16.msra.mxu0 0
  %74 = vmatprep.mubr.bf16.mxu0 0
  %75 = vmatmul.mubr.bf16.gmra.mrb[0].mxu0 %v40
  %v76 = vpop.f32.mrb[0].mxu0
  %v77 = vadd.f32 %v30, %v76
  %v78 = vpop.f32.mrb[0].mxu0
  %v79 = vpop.f32.mrb[0].mxu0
  %v80 = vpop.f32.mrb[0].mxu0
  %81 = vdwg.mxu0
  %v82 = vmax.f32 %v77, 0.0
  %v83 = vpack.c.bf16 %v82, %v82
  %v84 = vld [vmem:[%s3] sm:$0xf]
  %v85 = vld [vmem:[%s3 + $0x4] sm:$0xf]
  %v86 = vld [vmem:[%s3 + $0x8] sm:$0xf]
  %v87 = vld [vmem:[%s3 + $0xc] sm:$0xf]
  %v88 = vld [vmem:[%s3 + $0x10] sm:$0xf]
  %v89 = vld [vmem:[%s3 + $0x14] sm:$0xf]
  %v90 = vld [vmem:[%s3 + $0x18] sm:$0xf]
  %v91 = vld [vmem:[%s3 + $0x1c] sm:$0xf]
  %v92 = vld [vmem:[%s3 + $0x20] sm:$0xf]
  %v93 = vld [vmem:[%s3 + $0x24] sm:$0xf]
  %v94 = vld [vmem:[%s3 + $0x28] sm:$0xf]
  %v95 = vld [vmem:[%s3 + $0x2c] sm:$0xf]
  %v96 = vld [vmem:[%s3 + $0x30] sm:$0xf]
  %v97 = vld [vmem:[%s3 + $0x34] sm:$0xf]
  %v98 = vld [vmem:[%s3 + $0x38] sm:$0xf]
  %v99 = vld [vmem:[%s3 + $0x3c] sm:$0xf]
  %v100 = vld [vmem:[%s4] sm:$0x1]
  %v102 = vlaneseq
  %v103 = vshrl.u32 %v102, 7
  %v104 = vsub.s32 0, %v103
  %v105 = vrot.slane %v100, %v104
  %v123 = vunpack.c.l.b16 %v84
  %v124 = vunpack.c.l.b16 %v85
  %v125 = vunpack.c.l.b16 %v86
  %v126 = vunpack.c.l.b16 %v87
  %v127 = vunpack.c.l.b16 %v88
  %v128 = vunpack.c.l.b16 %v89
  %v129 = vunpack.c.l.b16 %v90
  %v130 = vunpack.c.l.b16 %v91
  %v131 = vunpack.c.l.b16 %v92
  %v132 = vunpack.c.l.b16 %v93
  %v133 = vunpack.c.l.b16 %v94
  %v134 = vunpack.c.l.b16 %v95
  %v135 = vunpack.c.l.b16 %v96
  %v136 = vunpack.c.l.b16 %v97
  %v137 = vunpack.c.l.b16 %v98
  %v138 = vunpack.c.l.b16 %v99
  %v139 = vpack.c.b16 %v124, %v123
  %v140 = vpack.c.b16 %v126, %v125
  %v141 = vpack.c.b16 %v128, %v127
  %v142 = vpack.c.b16 %v130, %v129
  %v143 = vpack.c.b16 %v132, %v131
  %v144 = vpack.c.b16 %v134, %v133
  %v145 = vpack.c.b16 %v136, %v135
  %v146 = vpack.c.b16 %v138, %v137
  %155 = vmatprep.subr.bf16.mxu0 0
  %156 = vmatpush1.bf16.msra.mxu0 %v139
  %157 = vmatprep.subr.bf16.mxu0 0
  %158 = vmatpush1.bf16.msra.mxu0 %v140
  %159 = vmatprep.subr.bf16.mxu0 0
  %160 = vmatpush1.bf16.msra.mxu0 %v141
  %161 = vmatprep.subr.bf16.mxu0 0
  %162 = vmatpush1.bf16.msra.mxu0 %v142
  %163 = vmatprep.subr.bf16.mxu0 0
  %164 = vmatpush1.bf16.msra.mxu0 %v143
  %165 = vmatprep.subr.bf16.mxu0 0
  %166 = vmatpush1.bf16.msra.mxu0 %v144
  %167 = vmatprep.subr.bf16.mxu0 0
  %168 = vmatpush1.bf16.msra.mxu0 %v145
  %169 = vmatprep.subr.bf16.mxu0 0
  %170 = vmatpush1.bf16.msra.mxu0 %v146
  %171 = vmatprep.subr.bf16.mxu0 0
  %172 = vmatpush1.bf16.msra.mxu0 0
  %173 = vmatprep.subr.bf16.mxu0 0
  %174 = vmatpush1.bf16.msra.mxu0 0
  %175 = vmatprep.subr.bf16.mxu0 0
  %176 = vmatpush1.bf16.msra.mxu0 0
  %177 = vmatprep.subr.bf16.mxu0 0
  %178 = vmatpush1.bf16.msra.mxu0 0
  %179 = vmatprep.subr.bf16.mxu0 0
  %180 = vmatpush1.bf16.msra.mxu0 0
  %181 = vmatprep.subr.bf16.mxu0 0
  %182 = vmatpush1.bf16.msra.mxu0 0
  %183 = vmatprep.subr.bf16.mxu0 0
  %184 = vmatpush1.bf16.msra.mxu0 0
  %185 = vmatprep.subr.bf16.mxu0 0
  %186 = vmatpush1.bf16.msra.mxu0 0
  %187 = vmatprep.mubr.bf16.mxu0 0
  %188 = vmatmul.mubr.bf16.gmra.mrb[0].mxu0 %v83
  %v189 = vpop.f32.mrb[0].mxu0
  %v190 = vadd.f32 %v105, %v189
  %v191 = vpop.f32.mrb[0].mxu0
  %v192 = vpop.f32.mrb[0].mxu0
  %v193 = vpop.f32.mrb[0].mxu0
  %194 = vdwg.mxu0
  %vm195 = vcmask 31744
  %196 = vst.msk [vmem:[%s5] sm:$0xff] %vm195, %v190
  // Predicated region
  $region22: #{tpu_custom_call.1} parent=0 // pred_check
    _
  $region23: #{tpu_custom_call.1} parent=0 // pred_check_branch
    %198 = sbr.rel (0) target = $region25
  $region24: #{tpu_custom_call.1} parent=0 // pred_region
    _
  $region25: #{tpu_custom_call.1} parent=0 // pred_fallthru
    _
  // Predicated region
  $region26: #{tpu_custom_call.1} parent=0 // pred_check
    _
  $region27: #{tpu_custom_call.1} parent=0 // pred_check_branch
    %200 = sbr.rel (0) target = $region29
  $region28: #{tpu_custom_call.1} parent=0 // pred_region
    _
  $region29: #{tpu_custom_call.1} parent=0 // pred_fallthru
    _

</llo_original>
